<compile_context>
chip_gen: v6e
topology: v6e:2x2x1
jax: 0.10.0
libtpu: 0.0.40
codegen_flags: <defaults>
</compile_context>

<pallas_src>
import jax
import jax.numpy as jnp
from jax.experimental import pallas as pl
from jax.experimental.pallas import tpu as pltpu


def _add_kernel(x_ref, lpe_ref, o_ref):
    # x_ref / o_ref: (tile_B, ...);  lpe_ref has a leading 1 -> broadcasts.
    o_ref[...] = (x_ref[...] + lpe_ref[...]).astype(o_ref.dtype)


def _cdiv(a, b):
    return -(-a // b)


def _chip_params():
    """Per-generation (block_target_bytes, vmem_limit_bytes, tensorcores_per_chip)."""
    kind = ""
    try:
        kind = jax.devices()[0].device_kind.lower()
    except Exception:
        pass
    if "v7" in kind:
        return 8 << 20, 48 << 20, 2     # 3.2 TB/s HBM, 64 MiB physical VMEM
    if "v6" in kind:
        return 6 << 20, 48 << 20, 1     # 1.4 TB/s HBM, 128 MiB VMEM
    # v5e / unknown: conservative, inside the 16 MiB scoped VMEM default.
    return 2 << 20, None, 1


def _sublane_multiple(itemsize):
    # f32 -> 8 rows/vreg, bf16/fp16 -> 16, int8/fp8 -> 32.
    return max(8, 32 // max(1, itemsize))


def _choose_tiles_2d(B, F, itemsize, target, sub):
    """Tiles for the flattened (B, F) layout; F is a multiple of 128."""
    # Lane tile: multiple of 128, capped so `sub` sublane rows stay <= target.
    cap = max(128, (target // (sub * itemsize)) // 128 * 128)
    tile_F = min(F, cap)
    rows = max(sub, (target // (tile_F * itemsize)) // sub * sub)
    tile_B = B if B <= rows else rows
    return tile_B, tile_F


def _choose_tiles_3d(B, T, D, itemsize, target, sub):
    """Tiles for (B, n_tokens, d_model) when F is not 128-aligned."""
    plane = D * itemsize                      # bytes per token row (full last dim)
    cap_t = max(sub, (target // (sub * plane)) // sub * sub)
    tile_T = T if T <= cap_t else cap_t
    rows = max(sub, (target // (tile_T * plane)) // sub * sub)
    tile_B = B if B <= rows else rows
    return tile_B, tile_T


def _megacore_split(tile_B, B, n_blocks_other, sub):
    """Guarantee >=2 grid blocks so both TensorCores get work (v7x)."""
    if n_blocks_other * _cdiv(B, tile_B) > 1:
        return tile_B
    if B >= 2 * sub:
        return max(sub, ((tile_B // 2) // sub) * sub)
    return tile_B


def learnable_positional_encoding(
    x,
    lpe,
    *,
    block_b=None,
    block_f=None,
    donate_x=False,
    min_pallas_bytes=2 << 20,
):
    """x: (B, n_tokens, d_model); lpe: (n_tokens, d_model) -> x + lpe."""
    B, T, D = x.shape
    assert lpe.shape == (T, D)

    # Match torch type promotion (e.g. bf16 x + f32 param -> f32 result).
    out_dtype = jnp.result_type(x.dtype, lpe.dtype)
    x = x.astype(out_dtype)
    lpe = lpe.astype(out_dtype)
    itemsize = jnp.dtype(out_dtype).itemsize

    # Small-input bypass: a pallas_call launch + single grid step would dominate;
    # XLA fuses this add into neighbors for free.
    if B * T * D * itemsize < min_pallas_bytes:
        return x + lpe[None]

    target, vmem_limit, n_cores = _chip_params()
    sub = _sublane_multiple(itemsize)
    cparams = pltpu.CompilerParams(
        dimension_semantics=("parallel", "parallel"),
        vmem_limit_bytes=vmem_limit,
    )
    io_alias = {0: 0} if donate_x else {}
    F = T * D

    if F % 128 == 0:
        # ---- 2-D path: lane-dense flattened feature axis -----------------
        x2 = x.reshape(B, F)          # contiguous row-major collapse (free)
        lpe2 = lpe.reshape(1, F)

        tile_B, tile_F = _choose_tiles_2d(B, F, itemsize, target, sub)
        if block_b is not None:
            tile_B = block_b
        if block_f is not None:
            tile_F = block_f
        if n_cores > 1:
            tile_B = _megacore_split(tile_B, B, _cdiv(F, tile_F), sub)

        grid = (_cdiv(F, tile_F), _cdiv(B, tile_B))   # batch innermost
        out2 = pl.pallas_call(
            _add_kernel,
            out_shape=jax.ShapeDtypeStruct((B, F), out_dtype),
            grid_spec=pltpu.PrefetchScalarGridSpec(
                num_scalar_prefetch=0,
                grid=grid,
                in_specs=[
                    pl.BlockSpec((tile_B, tile_F), lambda f, b: (b, f)),
                    # Constant block index across the (inner) batch axis ->
                    # the LPE tile stays VMEM-resident; fetched once per F-block.
                    pl.BlockSpec((1, tile_F), lambda f, b: (0, f)),
                ],
                out_specs=pl.BlockSpec((tile_B, tile_F), lambda f, b: (b, f)),
            ),
            compiler_params=cparams,
            input_output_aliases=io_alias,
        )(x2, lpe2)
        return out2.reshape(B, T, D)

    # ---- 3-D path: non-128-aligned F; full d_model as the last block dim ----
    lpe3 = lpe.reshape(1, T, D)
    tile_B, tile_T = _choose_tiles_3d(B, T, D, itemsize, target, sub)
    if block_b is not None:
        tile_B = block_b
    if n_cores > 1:
        tile_B = _megacore_split(tile_B, B, _cdiv(T, tile_T), sub)

    grid = (_cdiv(T, tile_T), _cdiv(B, tile_B))       # batch innermost
    out = pl.pallas_call(
        _add_kernel,
        out_shape=jax.ShapeDtypeStruct((B, T, D), out_dtype),
        grid_spec=pltpu.PrefetchScalarGridSpec(
            num_scalar_prefetch=0,
            grid=grid,
            in_specs=[
                pl.BlockSpec((tile_B, tile_T, D), lambda t, b: (b, t, 0)),
                pl.BlockSpec((1, tile_T, D), lambda t, b: (0, t, 0)),
            ],
            out_specs=pl.BlockSpec((tile_B, tile_T, D), lambda t, b: (b, t, 0)),
        ),
        compiler_params=cparams,
        input_output_aliases=io_alias,
    )(x, lpe3)
    return out


if __name__ == "__main__":
    key = jax.random.PRNGKey(0)
    kx, kp, kx2, kp2, kx3, kp3 = jax.random.split(key, 6)

    # ---- Test 1: module-sized shapes (batch=2, n_tokens=8, d_model=32) ------
    batch, n_tokens, d_model = 2, 8, 32
    lpe = jax.random.uniform(
        kp, (n_tokens, d_model), dtype=jnp.float32, minval=-0.02, maxval=0.02
    )
    x = jax.random.normal(kx, (batch, n_tokens, d_model), dtype=jnp.float32)
    out = jax.block_until_ready(
        learnable_positional_encoding(x, lpe, min_pallas_bytes=0)
    )
    assert out.shape == x.shape
    assert jnp.allclose(out, x + lpe[None, :, :], atol=1e-6), "mismatch (2-D path)"

    # ---- Test 2: multi-block grid on the 2-D path (LPE resident over batch) --
    B2, T2, D2 = 16, 8, 32            # F = 256 -> grid (2 F-blocks, 2 B-blocks)
    lpe_b = jax.random.uniform(
        kp2, (T2, D2), dtype=jnp.float32, minval=-0.02, maxval=0.02
    )
    x_b = jax.random.normal(kx2, (B2, T2, D2), dtype=jnp.float32)
    out_b = jax.block_until_ready(
        learnable_positional_encoding(
            x_b, lpe_b, block_b=8, block_f=128, min_pallas_bytes=0
        )
    )
    assert jnp.allclose(out_b, x_b + lpe_b[None, :, :], atol=1e-6), "mismatch (tiled)"

    # ---- Test 3: non-128-aligned feature plane -> 3-D blocking path ----------
    B3, T3, D3 = 4, 7, 48             # F = 336, not a multiple of 128
    lpe_c = jax.random.uniform(
        kp3, (T3, D3), dtype=jnp.float32, minval=-0.02, maxval=0.02
    )
    x_c = jax.random.normal(kx3, (B3, T3, D3), dtype=jnp.float32)
    out_c = jax.block_until_ready(
        learnable_positional_encoding(x_c, lpe_c, min_pallas_bytes=0)
    )
    assert jnp.allclose(out_c, x_c + lpe_c[None, :, :], atol=1e-6), "mismatch (3-D path)"

    print("KERNEL_OK")
</pallas_src>

<mosaic_0001>
module attributes {stable_mosaic.version = 11 : i64} {
  func.func @_add_kernel(%arg0: i32, %arg1: i32, %arg2: memref<2x256xf32, #tpu.memory_space<vmem>>, %arg3: memref<1x256xf32, #tpu.memory_space<vmem>>, %arg4: memref<2x256xf32, #tpu.memory_space<vmem>>) attributes {dimension_semantics = [#tpu.dimension_semantics<parallel>, #tpu.dimension_semantics<parallel>], iteration_bounds = array<i64: 1, 1>, scalar_prefetch = 0 : i64, scratch_operands = 0 : i64, tpu.core_type = #tpu.core_type<tc>, window_params = [{transform_indices = @transform_0, window_bounds = array<i64: 2, 256>}, {transform_indices = @transform_1, window_bounds = array<i64: 1, 256>}, {transform_indices = @transform_2, window_bounds = array<i64: 2, 256>}]} {
    %c0 = arith.constant 0 : index
    %c0_0 = arith.constant 0 : index
    %0 = vector.load %arg2[%c0, %c0_0] : memref<2x256xf32, #tpu.memory_space<vmem>>, vector<2x256xf32>
    %c0_1 = arith.constant 0 : index
    %c0_2 = arith.constant 0 : index
    %1 = vector.load %arg3[%c0_1, %c0_2] : memref<1x256xf32, #tpu.memory_space<vmem>>, vector<1x256xf32>
    %2 = vector.broadcast %1 : vector<1x256xf32> to vector<2x256xf32>
    %3 = arith.addf %0, %2 : vector<2x256xf32>
    %c0_3 = arith.constant 0 : index
    %c0_4 = arith.constant 0 : index
    %4 = vector.load %arg4[%c0_3, %c0_4] : memref<2x256xf32, #tpu.memory_space<vmem>>, vector<2x256xf32>
    tpu.vector_store %arg4[%c0_3, %c0_4], %3 {strides = array<i32>} : memref<2x256xf32, #tpu.memory_space<vmem>>, vector<2x256xf32>,
    return
  }
  func.func @transform_0(%arg0: i32, %arg1: i32) -> (i32, i32) {
    %c0_i32 = arith.constant 0 : i32
    return %arg1, %arg0 : i32, i32
  }
  func.func @transform_1(%arg0: i32, %arg1: i32) -> (i32, i32) {
    %c0_i32 = arith.constant 0 : i32
    %c0_i32_0 = arith.constant 0 : i32
    return %c0_i32, %arg0 : i32, i32
  }
  func.func @transform_2(%arg0: i32, %arg1: i32) -> (i32, i32) {
    %c0_i32 = arith.constant 0 : i32
    return %arg1, %arg0 : i32, i32
  }
}

</mosaic_0001>

<llo_original>
// kernel: tpu_custom_call.1
$region0: #{tpu_custom_call.1}
  #allocation0 [shape = 'u32[]', space=smem, size = 0x4, offset = 0x4, fixed_abs, tag = 'smem constant byte address 0x4 - core index']
  #allocation1 [shape = 'u32[144,128]{1,0:T(1,128)}', space=vmem, size = 0x12000, scoped, tag = 'internal scratch']
  %s0 = inlined_call_operand.hbm [shape: f32[2,256], index: 0, kind: input, shape index: {}]
  %s1 = inlined_call_operand.hbm [shape: f32[1,256], index: 1, kind: input, shape index: {}]
  %s2 = inlined_call_operand.hbm [shape: f32[2,256], index: 2, kind: output, shape index: {}]
  %s3 = sld [smem:[#allocation0]]
  $region26: #{tpu_custom_call.1} parent=0
    _
  %s5 = ssub.s32 1, %s3
  %s6 = scalar_select 0, %s5, %s3
  $region1: #{tpu_custom_call.1} parent=0
    #allocation2 [shape = 'u8[2048]{0}', space=vmem, size = 0x800, scoped, tag = 'input window, operand 0, single buffered']
    #allocation3 [shape = 's32[1]{0}', space=sflag, size = 0x4, scoped, tag = 'scoped memory for tpu_custom_call.1']
    #allocation4 [shape = 's32[1]{0}', space=sflag, size = 0x4, scoped, tag = 'scoped memory for tpu_custom_call.1']
    #allocation5 [shape = 'u8[1024]{0}', space=vmem, size = 0x400, scoped, tag = 'input window, operand 1, single buffered']
    #allocation6 [shape = 's32[1]{0}', space=sflag, size = 0x4, scoped, tag = 'scoped memory for tpu_custom_call.1']
    #allocation7 [shape = 'u8[2048]{0}', space=vmem, size = 0x800, scoped, tag = 'output window, operand 0, single buffered']
    %7 = vsyncpa [#allocation3], 0
    %8 = vsyncpa [#allocation6], 0
    %9 = vsyncpa [#allocation4], 0
    // Predicated region
    $region2: #{tpu_custom_call.1} parent=1 // pred_check
      _
    $region3: #{tpu_custom_call.1} parent=1 // pred_check_branch
      %11 = sbr.rel (0) target = $region5
    $region4: #{tpu_custom_call.1} parent=1 // pred_region
      %s13 = ssub.s32 64, 64
      %14 = vsyncadd [#allocation3], %s13
      %s16 = sshll.u32 [#allocation2], 4
      %s17 = int_to_ptr.vmem [resolvable:$true] %s16
      %19 = dma.hbm_to_vmem [thread:$0]  %s0, 64, %s17, [#allocation3]
    $region5: #{tpu_custom_call.1} parent=1 // pred_fallthru
      _
    // Predicated region
    $region6: #{tpu_custom_call.1} parent=1 // pred_check
      _
    $region7: #{tpu_custom_call.1} parent=1 // pred_check_branch
      %21 = sbr.rel (0) target = $region9
    $region8: #{tpu_custom_call.1} parent=1 // pred_region
      %s23 = ssub.s32 32, 32
      %24 = vsyncadd [#allocation6], %s23
      %s26 = sshll.u32 [#allocation5], 4
      %s27 = int_to_ptr.vmem [resolvable:$true] %s26
      %29 = dma.hbm_to_vmem [thread:$0]  %s1, 32, %s27, [#allocation6]
    $region9: #{tpu_custom_call.1} parent=1 // pred_fallthru
      _
    // Predicated region
    $region10: #{tpu_custom_call.1} parent=1 // pred_check
      _
    $region11: #{tpu_custom_call.1} parent=1 // pred_check_branch
      %31 = sbr.rel (0) target = $region13
    $region12: #{tpu_custom_call.1} parent=1 // pred_region
      %32 = dma.done [#allocation3], 64
    $region13: #{tpu_custom_call.1} parent=1 // pred_fallthru
      _
    // Predicated region
    $region14: #{tpu_custom_call.1} parent=1 // pred_check
      _
    $region15: #{tpu_custom_call.1} parent=1 // pred_check_branch
      %34 = sbr.rel (0) target = $region17
    $region16: #{tpu_custom_call.1} parent=1 // pred_region
      %35 = dma.done [#allocation6], 32
    $region17: #{tpu_custom_call.1} parent=1 // pred_fallthru
      _
    %v36 = vld [vmem:[#allocation2] sm:$0xf]
    %v37 = vld [vmem:[#allocation5] sm:$0x3]
    %v39 = vlaneseq
    %v40 = vshrl.u32 %v39, 7
    %v41 = vsub.s32 0, %v40
    %v42 = vrot.slane %v37, %v41
    %v43 = vlaneseq
    %v44 = vshrl.u32 %v43, 7
    %v45 = vsub.s32 1, %v44
    %v46 = vrot.slane %v37, %v45
    %v47 = vcombine.low %v42, %v46
    %v49 = vunpack.c.l.s4 1983009808
    %v50 = vunpack.c.0.s8 %v49
    %v51 = vlaneseq
    %v52 = vshrl.u32 %v51, 7
    %v53 = vsub.s32 %v50, %v52
    %v54 = vrot.slane %v47, %v53
    %v56 = vadd.f32 %v36, %v54
    %57 = vst [vmem:[#allocation7] sm:$0xf] %v56
    // Predicated region
    $region18: #{tpu_custom_call.1} parent=1 // pred_check
      _
    $region19: #{tpu_custom_call.1} parent=1 // pred_check_branch
      %59 = sbr.rel (0) target = $region21
    $region20: #{tpu_custom_call.1} parent=1 // pred_region
      %s61 = ssub.s32 64, 64
      %62 = vsyncadd [#allocation4], %s61
      %s64 = sshll.u32 [#allocation7], 4
      %s65 = int_to_ptr.vmem [resolvable:$true] %s64
      %67 = dma.vmem_to_hbm [thread:$0]  %s65, 64, %s2, [#allocation4]
    $region21: #{tpu_custom_call.1} parent=1 // pred_fallthru
      _
    // Predicated region
    $region22: #{tpu_custom_call.1} parent=1 // pred_check
      _
    $region23: #{tpu_custom_call.1} parent=1 // pred_check_branch
      %69 = sbr.rel (0) target = $region25
    $region24: #{tpu_custom_call.1} parent=1 // pred_region
      %70 = dma.done [#allocation4], 64
    $region25: #{tpu_custom_call.1} parent=1 // pred_fallthru
      _
    %71 = vsyncpa [#allocation3], 1
    %72 = vsyncpa [#allocation6], 1
    %73 = vsyncpa [#allocation4], 1

</llo_original>
